<compile_context>
chip_gen: v7x
topology: tpu7x:2x2x1
jax: 0.10.0
libtpu: 0.0.40
codegen_flags: <defaults>
</compile_context>

<pallas_src>
import functools

import jax
import jax.numpy as jnp
from jax import lax
from jax.experimental import pallas as pl
from jax.experimental.pallas import tpu as pltpu


def _finish(x, out_ref, *, class_axis, hard, approx_recip):
    """Store softmax(x) (soft) or one_hot(argmax(x)) (hard) along class_axis."""
    if hard:
        k = x.shape[class_axis]
        dim = class_axis % x.ndim
        iota = lax.broadcasted_iota(jnp.int32, x.shape, dim)
        xmax = jnp.max(x, axis=class_axis, keepdims=True)
        # first index attaining the max (matches torch argmax/scatter tie-break)
        masked = jnp.where(x == xmax, iota, jnp.int32(k))
        idx = jnp.min(masked, axis=class_axis, keepdims=True)
        y = (iota == idx).astype(jnp.float32)
    else:
        m = jnp.max(x, axis=class_axis, keepdims=True)
        e = jnp.exp(x - m)
        s = jnp.sum(e, axis=class_axis, keepdims=True)
        if approx_recip:
            y = e * pl.reciprocal(s, approx=True)  # EUP vrcp, own VLIW slot
        else:
            y = e / s
    out_ref[...] = y.astype(out_ref.dtype)


def _gumbel_noise(shape):
    """Standard Gumbel noise from the TPU hardware PRNG (seed beforehand)."""
    # Generate bits at an (8,128)-aligned shape (safe lowering), slice to shape.
    pad_s = (-shape[0]) % 8
    pad_l = (-shape[1]) % 128
    bits = pltpu.prng_random_bits((shape[0] + pad_s, shape[1] + pad_l))
    if bits.dtype != jnp.int32:
        bits = pltpu.bitcast(bits, jnp.int32)
    bits = bits[: shape[0], : shape[1]]
    # Low 23 bits -> uniform u in (0, 1); g = -log(-log(u)) is standard Gumbel.
    u = (bits & jnp.int32(0x7FFFFF)).astype(jnp.float32)
    u = u * jnp.float32(1.0 / 8388608.0) + jnp.float32(1e-9)
    return -jnp.log(-jnp.log(u))


def _kernel_softmax(seed_ref, logits_ref, out_ref, *, class_axis, hard, approx_recip):
    del seed_ref  # unused (no noise needed)
    x = logits_ref[...].astype(jnp.float32)
    _finish(x, out_ref, class_axis=class_axis, hard=hard, approx_recip=approx_recip)


def _kernel_gumbel_hw(seed_ref, logits_ref, out_ref, *, tau, class_axis, hard,
                      approx_recip):
    """Gumbel path with TPU hardware PRNG (noise drawn in-kernel)."""
    x = logits_ref[...].astype(jnp.float32)
    # Decorrelated per-tile seed: golden-ratio mix of user seed with the tile id.
    mixed = (seed_ref[0] * jnp.int32(-1640531535)  # 0x9E3779B1 as int32
             + (pl.program_id(0) + jnp.int32(1)) * jnp.int32(97531))
    pltpu.prng_seed(mixed)
    x = x + _gumbel_noise(x.shape)
    if not hard:
        # hard path: argmax((x+g)/tau) == argmax(x+g), so skip scale & softmax.
        x = x * jnp.float32(1.0 / tau)
    _finish(x, out_ref, class_axis=class_axis, hard=hard, approx_recip=approx_recip)


def _kernel_gumbel_noise(seed_ref, logits_ref, noise_ref, out_ref, *, tau,
                         class_axis, hard, approx_recip):
    """Gumbel path with precomputed noise (non-TPU / interpret backends)."""
    del seed_ref  # noise already drawn outside via jax.random
    x = logits_ref[...].astype(jnp.float32) + noise_ref[...].astype(jnp.float32)
    if not hard:
        x = x * jnp.float32(1.0 / tau)
    _finish(x, out_ref, class_axis=class_axis, hard=hard, approx_recip=approx_recip)


def categorical_activation(logits, temperature, training=True, seed=0):
    """JAX/Pallas equivalent of CategoricalActivation(temperature)(logits, training)."""
    assert logits.ndim == 2, "kernel supports [batch, num_classes] logits"
    B, K = logits.shape
    out_dtype = logits.dtype

    if temperature is not None:
        tau, hard, add_gumbel = float(temperature), (not training), True
    elif training:
        tau, hard, add_gumbel = 1.0, False, False
    else:
        # OneHotCategorical(logits).sample() == one_hot(argmax(logits + Gumbel))
        tau, hard, add_gumbel = 1.0, True, True

    on_tpu = jax.default_backend() == "tpu"
    approx_recip = on_tpu  # approx reciprocal lowering is TPU-only

    # Layout choice: small K -> sublane-major (K, B), batch on the 128-lane axis
    # (dense vregs, lane-dense stores). Otherwise batch-major (B, K). In both
    # layouts the class axis spans the full block dim, so no padding is needed.
    transposed = (K <= 64) and (B >= 2 * K)
    target_bytes = 1 << 20  # ~1 MiB f32 blocks: ~85% of HBM roofline; tiles +
    #                         elementwise temporaries fit v5e's 16 MiB scoped
    #                         VMEM and v7x's smaller VMEM with headroom.

    if transposed:
        x = logits.T                      # (K, B): class on sublanes
        class_axis = 0
        tb = max(128, (target_bytes // max(1, K * 4) // 128) * 128)
        if B >= 4 * 128:                  # keep >=4 grid steps when B allows
            tb = min(tb, max(128, (B // 4 // 128) * 128))
        tb = min(tb, B)
        if tb != B:
            tb = max(128, (tb // 128) * 128)
        block_shape = (K, tb)
        arr_shape = (K, B)
        idx_map = lambda i, s: (0, i)
    else:
        x = logits                        # (B, K): class spans full last dim
        class_axis = -1
        tb = max(8, (max(1, target_bytes // max(1, K * 4)) // 8) * 8)
        if B >= 4 * 8:                    # keep >=4 grid steps when B allows
            tb = min(tb, max(8, (B // 4 // 8) * 8))
        tb = min(tb, B)
        if tb != B:
            tb = max(8, (tb // 8) * 8)
        block_shape = (tb, K)
        arr_shape = (B, K)
        idx_map = lambda i, s: (i, 0)
        # TODO(synk): very large K (block >> a few MiB) would additionally need
        # class-axis tiling with a running max/sum; not required at these sizes.

    grid = (pl.cdiv(B, tb),)
    data_spec = pl.BlockSpec(block_shape, idx_map)
    seeds = jnp.asarray([seed], dtype=jnp.int32)

    # Advisory cost for XLA's scheduler (no MXU work => no default signal).
    n = B * K
    itemsize = jnp.dtype(out_dtype).itemsize
    if add_gumbel:
        transcendentals = (2 if hard else 4) * n
    else:
        transcendentals = 0 if hard else 2 * n
    bytes_accessed = 2 * n * itemsize + (n * 4 if (add_gumbel and not on_tpu) else 0)
    cost = pl.CostEstimate(flops=8 * n, transcendentals=int(transcendentals),
                           bytes_accessed=int(bytes_accessed))

    if add_gumbel and on_tpu:
        kernel = functools.partial(_kernel_gumbel_hw, tau=tau, class_axis=class_axis,
                                   hard=hard, approx_recip=approx_recip)
        in_specs = [data_spec]
        operands = (seeds, x)
    elif add_gumbel:
        # Non-TPU / interpret fallback: hardware PRNG has no lowering there.
        g = jax.random.gumbel(jax.random.PRNGKey(seed), arr_shape, dtype=jnp.float32)
        kernel = functools.partial(_kernel_gumbel_noise, tau=tau, class_axis=class_axis,
                                   hard=hard, approx_recip=approx_recip)
        in_specs = [data_spec, pl.BlockSpec(block_shape, idx_map)]
        operands = (seeds, x, g)
    else:
        kernel = functools.partial(_kernel_softmax, class_axis=class_axis,
                                   hard=hard, approx_recip=approx_recip)
        in_specs = [data_spec]
        operands = (seeds, x)

    out = pl.pallas_call(
        kernel,
        out_shape=jax.ShapeDtypeStruct(arr_shape, out_dtype),
        grid_spec=pltpu.PrefetchScalarGridSpec(
            num_scalar_prefetch=1,
            grid=grid,
            in_specs=in_specs,
            out_specs=pl.BlockSpec(block_shape, idx_map),
        ),
        compiler_params=pltpu.CompilerParams(
            # Batch tiles are independent -> shard across v7x's two TensorCores.
            dimension_semantics=("parallel",),
        ),
        cost_estimate=cost,
    )(*operands)

    if transposed:
        out = out.T
    return out
    # TODO(synk): no straight-through gradient (custom_vjp) for the hard path;
    # matches the PyTorch module, which only uses hard=True at eval time.


if __name__ == "__main__":
    key = jax.random.PRNGKey(0)

    # Small K (typical categorical head) -> sublane-major (K, B) layout.
    B, K = 64, 10
    logits = jax.random.normal(key, (B, K), dtype=jnp.float32)

    y_soft = categorical_activation(logits, temperature=0.5, training=True, seed=1)
    y_hard = categorical_activation(logits, temperature=0.5, training=False, seed=2)
    y_sm = categorical_activation(logits, temperature=None, training=True)
    y_cat = categorical_activation(logits, temperature=None, training=False, seed=3)
    jax.block_until_ready((y_soft, y_hard, y_sm, y_cat))

    # Lane-sized class axis -> batch-major (B, K) layout, no padding.
    logits2 = jax.random.normal(jax.random.PRNGKey(1), (16, 128), dtype=jnp.float32)
    y2_sm = categorical_activation(logits2, temperature=None, training=True)
    y2_hard = categorical_activation(logits2, temperature=0.25, training=False, seed=4)
    jax.block_until_ready((y2_sm, y2_hard))

    # Multi-step grid (>=2 tiles: pipelining overlap + megacore sharding).
    logits3 = jax.random.normal(jax.random.PRNGKey(2), (512, 12), dtype=jnp.float32)
    y3 = categorical_activation(logits3, temperature=1.0, training=True, seed=5)
    jax.block_until_ready(y3)

    # Sanity checks.
    assert y_soft.shape == (B, K) and y_sm.shape == (B, K)
    assert jnp.allclose(jnp.sum(y_soft, axis=-1), 1.0, atol=1e-3)
    assert jnp.allclose(jnp.sum(y_sm, axis=-1), 1.0, atol=1e-3)
    assert jnp.allclose(y_sm, jax.nn.softmax(logits, axis=1), atol=1e-2)
    assert jnp.allclose(y2_sm, jax.nn.softmax(logits2, axis=1), atol=1e-2)
    assert jnp.all(jnp.sum(y_hard, axis=-1) == 1.0)
    assert jnp.all((y_hard == 0.0) | (y_hard == 1.0))
    assert jnp.all(jnp.sum(y_cat, axis=-1) == 1.0)
    assert jnp.all((y_cat == 0.0) | (y_cat == 1.0))
    assert jnp.all(jnp.sum(y2_hard, axis=-1) == 1.0)
    assert jnp.all((y2_hard == 0.0) | (y2_hard == 1.0))
    assert y3.shape == (512, 12)
    assert jnp.allclose(jnp.sum(y3, axis=-1), 1.0, atol=1e-3)

    print("KERNEL_OK")
</pallas_src>

<mosaic_0001>
module attributes {stable_mosaic.version = 11 : i64} {
  func.func @_kernel_gumbel_noise(%arg0: i32, %arg1: memref<1xi32, #tpu.memory_space<smem>>, %arg2: memref<10x64xf32, #tpu.memory_space<vmem>>, %arg3: memref<10x64xf32, #tpu.memory_space<vmem>>, %arg4: memref<10x64xf32, #tpu.memory_space<vmem>>) attributes {dimension_semantics = [#tpu.dimension_semantics<parallel>], iteration_bounds = array<i64: 1>, scalar_prefetch = 1 : i64, scratch_operands = 0 : i64, tpu.core_type = #tpu.core_type<tc>, window_params = [{transform_indices = @transform_0, window_bounds = array<i64: 10, 64>}, {transform_indices = @transform_1, window_bounds = array<i64: 10, 64>}, {transform_indices = @transform_2, window_bounds = array<i64: 10, 64>}]} {
    %c0 = arith.constant 0 : index
    %c0_0 = arith.constant 0 : index
    %0 = vector.load %arg2[%c0, %c0_0] : memref<10x64xf32, #tpu.memory_space<vmem>>, vector<10x64xf32>
    %c0_1 = arith.constant 0 : index
    %c0_2 = arith.constant 0 : index
    %1 = vector.load %arg3[%c0_1, %c0_2] : memref<10x64xf32, #tpu.memory_space<vmem>>, vector<10x64xf32>
    %2 = arith.addf %0, %1 : vector<10x64xf32>
    %cst = arith.constant 2.000000e+00 : f32
    %3 = vector.broadcast %cst : f32 to vector<10x64xf32>
    %4 = arith.mulf %2, %3 : vector<10x64xf32>
    %cst_3 = arith.constant dense<0xFF800000> : vector<64xf32>
    %5 = vector.multi_reduction <maximumf>, %4, %cst_3 [0] : vector<10x64xf32> to vector<64xf32>
    %6 = vector.shape_cast %5 : vector<64xf32> to vector<1x64xf32>
    %7 = vector.broadcast %6 : vector<1x64xf32> to vector<10x64xf32>
    %8 = arith.subf %4, %7 : vector<10x64xf32>
    %9 = math.exp %8 : vector<10x64xf32>
    %cst_4 = arith.constant dense<0.000000e+00> : vector<64xf32>
    %10 = vector.multi_reduction <add>, %9, %cst_4 [0] : vector<10x64xf32> to vector<64xf32>
    %11 = vector.shape_cast %10 : vector<64xf32> to vector<1x64xf32>
    %12 = vector.broadcast %11 : vector<1x64xf32> to vector<10x64xf32>
    %13 = arith.divf %9, %12 : vector<10x64xf32>
    %c0_5 = arith.constant 0 : index
    %c0_6 = arith.constant 0 : index
    %14 = vector.load %arg4[%c0_5, %c0_6] : memref<10x64xf32, #tpu.memory_space<vmem>>, vector<10x64xf32>
    tpu.vector_store %arg4[%c0_5, %c0_6], %13 {strides = array<i32>} : memref<10x64xf32, #tpu.memory_space<vmem>>, vector<10x64xf32>,
    return
  }
  func.func @transform_0(%arg0: i32, %arg1: memref<1xi32, #tpu.memory_space<smem>>) -> (i32, i32) {
    %c0_i32 = arith.constant 0 : i32
    %c0_i32_0 = arith.constant 0 : i32
    return %c0_i32, %arg0 : i32, i32
  }
  func.func @transform_1(%arg0: i32, %arg1: memref<1xi32, #tpu.memory_space<smem>>) -> (i32, i32) {
    %c0_i32 = arith.constant 0 : i32
    %c0_i32_0 = arith.constant 0 : i32
    return %c0_i32, %arg0 : i32, i32
  }
  func.func @transform_2(%arg0: i32, %arg1: memref<1xi32, #tpu.memory_space<smem>>) -> (i32, i32) {
    %c0_i32 = arith.constant 0 : i32
    %c0_i32_0 = arith.constant 0 : i32
    return %c0_i32, %arg0 : i32, i32
  }
}

</mosaic_0001>

<llo_original>
// kernel: tpu_custom_call.1
$region0: #{tpu_custom_call.1}
  #allocation0 [shape = 'u32[]', space=smem, size = 0x4, offset = 0x4, fixed_abs, tag = 'smem constant byte address 0x4 - core index']
  #allocation1 [shape = 'u32[144,128]{1,0:T(1,128)}', space=vmem, size = 0x12000, scoped, tag = 'internal scratch']
  #allocation2 [shape = 's32[1]{0}', space=sflag, size = 0x4, scoped, tag = 'scoped memory for tpu_custom_call.1']
  #allocation3 [shape = 's32[1]{0:T(128)S(6)}', space=smem, size = 0x200, scoped, tag = 'prefetched SMEM operand 0']
  %s0 = inlined_call_operand.<no memory space> [shape: s32[1], index: 0, kind: input, shape index: {}]
  %s1 = inlined_call_operand.hbm [shape: f32[10,64], index: 1, kind: input, shape index: {}]
  %s2 = inlined_call_operand.hbm [shape: f32[10,64], index: 2, kind: input, shape index: {}]
  %s3 = inlined_call_operand.hbm [shape: f32[10,64], index: 3, kind: output, shape index: {}]
  %s4 = sld [smem:[#allocation0]]
  $region26: #{tpu_custom_call.1} parent=0
    _
  %s6 = ssub.s32 1, %s4
  %s7 = scalar_select 0, %s6, %s4
  %8 = sst [smem:[#allocation3]] %s0
  $region1: #{tpu_custom_call.1} parent=0
    #allocation4 [shape = 'u8[8192]{0}', space=vmem, size = 0x2000, scoped, tag = 'input window, operand 1, single buffered']
    #allocation5 [shape = 's32[1]{0}', space=sflag, size = 0x4, scoped, tag = 'scoped memory for tpu_custom_call.1']
    #allocation6 [shape = 's32[1]{0}', space=sflag, size = 0x4, scoped, tag = 'scoped memory for tpu_custom_call.1']
    #allocation7 [shape = 'u8[8192]{0}', space=vmem, size = 0x2000, scoped, tag = 'input window, operand 2, single buffered']
    #allocation8 [shape = 's32[1]{0}', space=sflag, size = 0x4, scoped, tag = 'scoped memory for tpu_custom_call.1']
    #allocation9 [shape = 'u8[8192]{0}', space=vmem, size = 0x2000, scoped, tag = 'output window, operand 0, single buffered']
    %9 = vsyncpa [#allocation5], 0
    %10 = vsyncpa [#allocation8], 0
    %11 = vsyncpa [#allocation6], 0
    // Predicated region
    $region2: #{tpu_custom_call.1} parent=1 // pred_check
      _
    $region3: #{tpu_custom_call.1} parent=1 // pred_check_branch
      %13 = sbr.rel (0) target = $region5
    $region4: #{tpu_custom_call.1} parent=1 // pred_region
      %s15 = ssub.s32 256, 256
      %16 = vsyncadd [#allocation5], %s15
      %s17 = sshll.u32 [#allocation4], 4
      %s18 = int_to_ptr.vmem [resolvable:$true] %s17
      %23 = dma.hbm_to_vmem [thread:$0]  %s1, 256, %s18, [#allocation5], 128, 128, 8
    $region5: #{tpu_custom_call.1} parent=1 // pred_fallthru
      _
    // Predicated region
    $region6: #{tpu_custom_call.1} parent=1 // pred_check
      _
    $region7: #{tpu_custom_call.1} parent=1 // pred_check_branch
      %25 = sbr.rel (0) target = $region9
    $region8: #{tpu_custom_call.1} parent=1 // pred_region
      %s27 = ssub.s32 256, 256
      %28 = vsyncadd [#allocation8], %s27
      %s29 = sshll.u32 [#allocation7], 4
      %s30 = int_to_ptr.vmem [resolvable:$true] %s29
      %35 = dma.hbm_to_vmem [thread:$0]  %s2, 256, %s30, [#allocation8], 128, 128, 8
    $region9: #{tpu_custom_call.1} parent=1 // pred_fallthru
      _
    // Predicated region
    $region10: #{tpu_custom_call.1} parent=1 // pred_check
      _
    $region11: #{tpu_custom_call.1} parent=1 // pred_check_branch
      %37 = sbr.rel (0) target = $region13
    $region12: #{tpu_custom_call.1} parent=1 // pred_region
      %38 = dma.done [#allocation5], 256
    $region13: #{tpu_custom_call.1} parent=1 // pred_fallthru
      _
    // Predicated region
    $region14: #{tpu_custom_call.1} parent=1 // pred_check
      _
    $region15: #{tpu_custom_call.1} parent=1 // pred_check_branch
      %40 = sbr.rel (0) target = $region17
    $region16: #{tpu_custom_call.1} parent=1 // pred_region
      %41 = dma.done [#allocation8], 256
    $region17: #{tpu_custom_call.1} parent=1 // pred_fallthru
      _
    %v42 = vld [vmem:[#allocation4] sm:$0xff]
    %v43 = vld [vmem:[#allocation4 + $0x8] sm:$0x3]
    %v44 = vld [vmem:[#allocation7] sm:$0xff]
    %v45 = vld [vmem:[#allocation7 + $0x8] sm:$0x3]
    %v46 = vadd.f32 %v42, %v44
    %v47 = vadd.f32 %v43, %v45
    %v48 = vmul.f32 %v46, 2.0
    %v49 = vmul.f32 %v47, 2.0
    %vm50 = vcmask 523264
    %v51 = vsel %vm50, %v48, -inf
    %vm52 = vcmask 517120
    %v53 = vsel %vm52, %v49, -inf
    %v54 = vmax.f32 %v51, %v53
    %v55 = vrot.slane %v54, 4
    %v56 = vmax.f32 %v54, %v55
    %v57 = vrot.slane %v56, 2
    %v58 = vmax.f32 %v56, %v57
    %v59 = vrot.slane %v58, 1
    %v60 = vmax.f32 %v58, %v59
    %v61 = vsub.f32 %v48, %v60
    %v62 = vsub.f32 %v49, %v60
    %v63 = vmul.f32 %v61, 1.442695
    %v64 = vpow.pop %v63
    %v65 = vmul.f32 %v62, 1.442695
    %v66 = vpow.pop %v65
    %v67 = vsel %vm50, %v64, 0.0
    %v68 = vsel %vm52, %v66, 0.0
    %v69 = vadd.f32 %v67, %v68
    %v70 = vrot.slane %v69, 4
    %v71 = vadd.f32 %v69, %v70
    %v72 = vrot.slane %v71, 2
    %v73 = vadd.f32 %v71, %v72
    %v74 = vrot.slane %v73, 1
    %v75 = vadd.f32 %v73, %v74
    %v76 = vrcp.pop %v75
    %v77 = vmul.f32 %v64, %v76
    %v78 = vmul.f32 %v66, %v76
    %79 = vst.msk [vmem:[#allocation9] sm:$0xff] %vm50, %v77
    %80 = vst.msk [vmem:[#allocation9 + $0x8] sm:$0x3] %vm52, %v78
    // Predicated region
    $region18: #{tpu_custom_call.1} parent=1 // pred_check
      _
    $region19: #{tpu_custom_call.1} parent=1 // pred_check_branch
      %82 = sbr.rel (0) target = $region21
    $region20: #{tpu_custom_call.1} parent=1 // pred_region
      %s84 = ssub.s32 256, 256
      %85 = vsyncadd [#allocation6], %s84
      %s86 = sshll.u32 [#allocation9], 4
      %s87 = int_to_ptr.vmem [resolvable:$true] %s86
      %92 = dma.vmem_to_hbm [thread:$0]  %s87, 256, %s3, [#allocation6], 128, 128, 8
    $region21: #{tpu_custom_call.1} parent=1 // pred_fallthru
      _
    // Predicated region
    $region22: #{tpu_custom_call.1} parent=1 // pred_check
      _
    $region23: #{tpu_custom_call.1} parent=1 // pred_check_branch
      %94 = sbr.rel (0) target = $region25
    $region24: #{tpu_custom_call.1} parent=1 // pred_region
      %95 = dma.done [#allocation6], 256
    $region25: #{tpu_custom_call.1} parent=1 // pred_fallthru
      _
    %96 = vsyncpa [#allocation5], 1
    %97 = vsyncpa [#allocation8], 1
    %98 = vsyncpa [#allocation6], 1

</llo_original>
